<compile_context>
chip_gen: v7x
topology: tpu7x:2x2x1
jax: 0.10.0
libtpu: 0.0.40
codegen_flags: <defaults>
</compile_context>

<pallas_src>
import jax
import jax.numpy as jnp
from jax.experimental import pallas as pl
from jax.experimental.pallas import tpu as pltpu


def _ctde_fused_kernel(lobs_ref, gobs_ref, w1l_ref, w1g_ref, b1_ref,
                       w2_ref, b2_ref, w3_ref, b3_ref, out_ref):
    # Layer 1 (both branches fused; W1l/W1g occupy disjoint column blocks):
    #   h[:, :32] = local @ w1l + b1l ,  h[:, 32:] = global @ w1g + b1g
    h = (jnp.dot(lobs_ref[...], w1l_ref[...], preferred_element_type=jnp.float32)
         + jnp.dot(gobs_ref[...], w1g_ref[...], preferred_element_type=jnp.float32)
         + b1_ref[...])
    h = jnp.maximum(h, 0.0)
    # Layer 2: block-diagonal (64, 128) -> ReLU
    h = jnp.dot(h, w2_ref[...], preferred_element_type=jnp.float32) + b2_ref[...]
    h = jnp.maximum(h, 0.0)
    # Heads: block-diagonal (128, act+1); columns [0:act] = logit, column act = value
    out_ref[...] = (jnp.dot(h, w3_ref[...], preferred_element_type=jnp.float32)
                    + b3_ref[...])


def pack_params(params):
    """Fuse the two branches into block-diagonal weights (done once)."""
    L, h1l = params["w1l"].shape
    G, h1g = params["w1g"].shape
    assert h1l == 32 and h1g == 32, "layer-1 hidden widths must both be 32"
    assert params["w2l"].shape == (32, 64), params["w2l"].shape
    assert params["w2g"].shape == (32, 64), params["w2g"].shape
    assert params["wp"].shape[0] == 64 and params["wv"].shape == (64, 1)
    act = int(params["wp"].shape[1])
    H1, H2 = 64, 128

    # Layer-1 weights kept separate per input stream but padded to the full
    # 64-wide hidden so the kernel can simply sum the two dots.
    w1l = jnp.zeros((L, H1), jnp.float32).at[:, :32].set(params["w1l"])
    w1g = jnp.zeros((G, H1), jnp.float32).at[:, 32:].set(params["w1g"])
    b1 = jnp.concatenate([params["b1l"], params["b1g"]], axis=-1)      # (1, 64)

    w2 = jnp.zeros((H1, H2), jnp.float32)
    w2 = w2.at[:32, :64].set(params["w2l"])
    w2 = w2.at[32:, 64:].set(params["w2g"])
    b2 = jnp.concatenate([params["b2l"], params["b2g"]], axis=-1)      # (1, 128)

    w3 = jnp.zeros((H2, act + 1), jnp.float32)
    w3 = w3.at[:64, :act].set(params["wp"])
    w3 = w3.at[64:, act:].set(params["wv"])
    b3 = jnp.concatenate([params["bp"], params["bv"]], axis=-1)        # (1, act+1)

    return dict(w1l=w1l, w1g=w1g, b1=b1, w2=w2, b2=b2, w3=w3, b3=b3, act=act)


def _round_up(x, m):
    return ((x + m - 1) // m) * m


def ctde_actor_critic_forward(local_obs, global_obs, packed, *, tile_rows=4096):
    """local_obs: (B, A, L) f32; global_obs: (B, A, G) or (B, G) f32.
    Returns {'logit': (B, A, act), 'value': (B, A, 1)}."""
    B, A, L = local_obs.shape
    if global_obs.ndim == 2:
        # TODO(synk): shared global state is broadcast per agent (one extra HBM
        # pass); could be avoided by running the value branch on B rows only.
        global_obs = jnp.broadcast_to(
            global_obs[:, None, :], (B, A, global_obs.shape[-1]))
    G = global_obs.shape[-1]
    N = B * A
    act = packed["act"]
    F_out = act + 1
    H1, H2 = 64, 128

    lobs = local_obs.reshape(N, L)
    gobs = global_obs.reshape(N, G)

    # Row tile: multiple of 8; capped by round_up(N, 8) and by an occupancy
    # bound (>= ~4 grid steps for large N so v7x megacore shards the grid).
    N8 = _round_up(N, 8)
    occ_cap = max(8, _round_up(-(-N // 4), 8))
    TM = max(8, min((int(tile_rows) // 8) * 8, N8, occ_cap))
    grid = (pl.cdiv(N, TM),)

    flops = 2 * N * (L * H1 + G * H1 + H1 * H2 + H2 * F_out)
    bytes_accessed = 4 * (
        N * (L + G + F_out)                                   # streamed obs + out
        + L * H1 + G * H1 + H1 + H1 * H2 + H2 + H2 * F_out + F_out)  # resident params

    out = pl.pallas_call(
        _ctde_fused_kernel,
        out_shape=jax.ShapeDtypeStruct((N, F_out), jnp.float32),
        grid=grid,
        in_specs=[
            pl.BlockSpec((TM, L), lambda i: (i, 0)),       # local obs rows (pipelined)
            pl.BlockSpec((TM, G), lambda i: (i, 0)),       # global obs rows (pipelined)
            pl.BlockSpec((L, H1), lambda i: (0, 0)),       # W1 local  (resident)
            pl.BlockSpec((G, H1), lambda i: (0, 0)),       # W1 global (resident)
            pl.BlockSpec((1, H1), lambda i: (0, 0)),       # b1
            pl.BlockSpec((H1, H2), lambda i: (0, 0)),      # W2
            pl.BlockSpec((1, H2), lambda i: (0, 0)),       # b2
            pl.BlockSpec((H2, F_out), lambda i: (0, 0)),   # W3
            pl.BlockSpec((1, F_out), lambda i: (0, 0)),    # b3
        ],
        out_specs=pl.BlockSpec((TM, F_out), lambda i: (i, 0)),
        compiler_params=pltpu.CompilerParams(
            dimension_semantics=("parallel",),
            vmem_limit_bytes=48 * 1024 * 1024,
        ),
        cost_estimate=pl.CostEstimate(
            flops=flops, transcendentals=0, bytes_accessed=bytes_accessed),
    )(lobs, gobs, packed["w1l"], packed["w1g"], packed["b1"],
      packed["w2"], packed["b2"], packed["w3"], packed["b3"])

    logit = out[:, :act].reshape(B, A, act)
    value = out[:, act:].reshape(B, A, 1)
    return {"logit": logit, "value": value}


def init_params(key, local_obs_shape, global_obs_shape, action_shape):
    """Deterministic synthetic parameters. Weights stored (in, out); biases (1, out)."""
    ks = jax.random.split(key, 12)

    def lin(kw, kb, din, dout):
        bound = 1.0 / jnp.sqrt(jnp.float32(din))
        w = jax.random.uniform(kw, (din, dout), jnp.float32, -bound, bound)
        b = jax.random.uniform(kb, (1, dout), jnp.float32, -bound, bound)
        return w, b

    w1l, b1l = lin(ks[0], ks[1], local_obs_shape, 32)
    w2l, b2l = lin(ks[2], ks[3], 32, 64)
    wp, bp = lin(ks[4], ks[5], 64, action_shape)
    w1g, b1g = lin(ks[6], ks[7], global_obs_shape, 32)
    w2g, b2g = lin(ks[8], ks[9], 32, 64)
    wv, bv = lin(ks[10], ks[11], 64, 1)
    return dict(
        w1l=w1l, b1l=b1l, w2l=w2l, b2l=b2l, wp=wp, bp=bp,
        w1g=w1g, b1g=b1g, w2g=w2g, b2g=b2g, wv=wv, bv=bv,
    )


def _reference(local_obs, global_obs, params):
    # pure-JAX reference for correctness check (un-fused, like the torch module)
    B, A, L = local_obs.shape
    x = local_obs.reshape(B * A, L)
    g = global_obs.reshape(B * A, -1)
    h = jnp.maximum(x @ params["w1l"] + params["b1l"], 0.0)
    h = jnp.maximum(h @ params["w2l"] + params["b2l"], 0.0)
    logit = h @ params["wp"] + params["bp"]
    z = jnp.maximum(g @ params["w1g"] + params["b1g"], 0.0)
    z = jnp.maximum(z @ params["w2g"] + params["b2g"], 0.0)
    value = z @ params["wv"] + params["bv"]
    return {"logit": logit.reshape(B, A, -1), "value": value.reshape(B, A, 1)}


if __name__ == "__main__":
    # small shapes: batch=2, agents=4, local_obs=16, global_obs=24, actions=5
    B, A = 2, 4
    LOCAL_OBS, GLOBAL_OBS, ACTIONS = 16, 24, 5

    key = jax.random.PRNGKey(0)
    k_param, k_local, k_global = jax.random.split(key, 3)

    params = init_params(k_param, LOCAL_OBS, GLOBAL_OBS, ACTIONS)
    packed = pack_params(params)
    local_obs = jax.random.normal(k_local, (B, A, LOCAL_OBS), jnp.float32)
    global_obs = jax.random.normal(k_global, (B, A, GLOBAL_OBS), jnp.float32)

    out = ctde_actor_critic_forward(local_obs, global_obs, packed)
    jax.block_until_ready(out)

    ref = _reference(local_obs, global_obs, params)
    assert out["logit"].shape == (B, A, ACTIONS)
    assert out["value"].shape == (B, A, 1)
    assert jnp.allclose(out["logit"], ref["logit"], atol=1e-5, rtol=1e-5)
    assert jnp.allclose(out["value"], ref["value"], atol=1e-5, rtol=1e-5)

    # Second check: N not a multiple of the row tile (exercises the un-padded
    # partial-block path that replaced the wrapper-side jnp.pad).
    B2, A2 = 3, 5
    k2l, k2g = jax.random.split(jax.random.PRNGKey(1), 2)
    lo2 = jax.random.normal(k2l, (B2, A2, LOCAL_OBS), jnp.float32)
    go2 = jax.random.normal(k2g, (B2, A2, GLOBAL_OBS), jnp.float32)
    out2 = ctde_actor_critic_forward(lo2, go2, packed, tile_rows=8)
    jax.block_until_ready(out2)
    ref2 = _reference(lo2, go2, params)
    assert jnp.allclose(out2["logit"], ref2["logit"], atol=1e-5, rtol=1e-5)
    assert jnp.allclose(out2["value"], ref2["value"], atol=1e-5, rtol=1e-5)

    print("KERNEL_OK")
</pallas_src>

<mosaic_0001>
module attributes {stable_mosaic.version = 11 : i64} {
  func.func @_ctde_fused_kernel(%arg0: i32, %arg1: memref<8x16xf32, #tpu.memory_space<vmem>>, %arg2: memref<8x24xf32, #tpu.memory_space<vmem>>, %arg3: memref<16x64xf32, #tpu.memory_space<vmem>>, %arg4: memref<24x64xf32, #tpu.memory_space<vmem>>, %arg5: memref<1x64xf32, #tpu.memory_space<vmem>>, %arg6: memref<64x128xf32, #tpu.memory_space<vmem>>, %arg7: memref<1x128xf32, #tpu.memory_space<vmem>>, %arg8: memref<128x6xf32, #tpu.memory_space<vmem>>, %arg9: memref<1x6xf32, #tpu.memory_space<vmem>>, %arg10: memref<8x6xf32, #tpu.memory_space<vmem>>) attributes {dimension_semantics = [#tpu.dimension_semantics<parallel>], iteration_bounds = array<i64: 1>, scalar_prefetch = 0 : i64, scratch_operands = 0 : i64, tpu.core_type = #tpu.core_type<tc>, window_params = [{transform_indices = @transform_0, window_bounds = array<i64: 8, 16>}, {transform_indices = @transform_1, window_bounds = array<i64: 8, 24>}, {pipeline_mode = #tpu.pipeline_mode<synchronous>, transform_indices = @transform_2, window_bounds = array<i64: 16, 64>}, {pipeline_mode = #tpu.pipeline_mode<synchronous>, transform_indices = @transform_3, window_bounds = array<i64: 24, 64>}, {pipeline_mode = #tpu.pipeline_mode<synchronous>, transform_indices = @transform_4, window_bounds = array<i64: 1, 64>}, {pipeline_mode = #tpu.pipeline_mode<synchronous>, transform_indices = @transform_5, window_bounds = array<i64: 64, 128>}, {pipeline_mode = #tpu.pipeline_mode<synchronous>, transform_indices = @transform_6, window_bounds = array<i64: 1, 128>}, {pipeline_mode = #tpu.pipeline_mode<synchronous>, transform_indices = @transform_7, window_bounds = array<i64: 128, 6>}, {pipeline_mode = #tpu.pipeline_mode<synchronous>, transform_indices = @transform_8, window_bounds = array<i64: 1, 6>}, {transform_indices = @transform_9, window_bounds = array<i64: 8, 6>}]} {
    %c0 = arith.constant 0 : index
    %c0_0 = arith.constant 0 : index
    %0 = vector.load %arg1[%c0, %c0_0] : memref<8x16xf32, #tpu.memory_space<vmem>>, vector<8x16xf32>
    %c0_1 = arith.constant 0 : index
    %c0_2 = arith.constant 0 : index
    %1 = vector.load %arg3[%c0_1, %c0_2] : memref<16x64xf32, #tpu.memory_space<vmem>>, vector<16x64xf32>
    %cst = arith.constant dense<0.000000e+00> : vector<8x64xf32>
    %2 = tpu.matmul %0, %1, %cst {dimension_numbers = #tpu.dot_dimension_numbers<[1], [0], [0], [1], [0, 0, 1, 1], [], []>} : vector<8x16xf32>, vector<16x64xf32>, vector<8x64xf32> -> vector<8x64xf32>
    %c0_3 = arith.constant 0 : index
    %c0_4 = arith.constant 0 : index
    %3 = vector.load %arg2[%c0_3, %c0_4] : memref<8x24xf32, #tpu.memory_space<vmem>>, vector<8x24xf32>
    %c0_5 = arith.constant 0 : index
    %c0_6 = arith.constant 0 : index
    %4 = vector.load %arg4[%c0_5, %c0_6] : memref<24x64xf32, #tpu.memory_space<vmem>>, vector<24x64xf32>
    %cst_7 = arith.constant dense<0.000000e+00> : vector<8x64xf32>
    %5 = tpu.matmul %3, %4, %cst_7 {dimension_numbers = #tpu.dot_dimension_numbers<[1], [0], [0], [1], [0, 0, 1, 1], [], []>} : vector<8x24xf32>, vector<24x64xf32>, vector<8x64xf32> -> vector<8x64xf32>
    %6 = arith.addf %2, %5 : vector<8x64xf32>
    %c0_8 = arith.constant 0 : index
    %c0_9 = arith.constant 0 : index
    %7 = vector.load %arg5[%c0_8, %c0_9] : memref<1x64xf32, #tpu.memory_space<vmem>>, vector<1x64xf32>
    %8 = vector.broadcast %7 : vector<1x64xf32> to vector<8x64xf32>
    %9 = arith.addf %6, %8 : vector<8x64xf32>
    %cst_10 = arith.constant 0.000000e+00 : f32
    %10 = vector.broadcast %cst_10 : f32 to vector<8x64xf32>
    %11 = arith.maximumf %9, %10 : vector<8x64xf32>
    %c0_11 = arith.constant 0 : index
    %c0_12 = arith.constant 0 : index
    %12 = vector.load %arg6[%c0_11, %c0_12] : memref<64x128xf32, #tpu.memory_space<vmem>>, vector<64x128xf32>
    %cst_13 = arith.constant dense<0.000000e+00> : vector<8x128xf32>
    %13 = tpu.matmul %11, %12, %cst_13 {dimension_numbers = #tpu.dot_dimension_numbers<[1], [0], [0], [1], [0, 0, 1, 1], [], []>} : vector<8x64xf32>, vector<64x128xf32>, vector<8x128xf32> -> vector<8x128xf32>
    %c0_14 = arith.constant 0 : index
    %c0_15 = arith.constant 0 : index
    %14 = vector.load %arg7[%c0_14, %c0_15] : memref<1x128xf32, #tpu.memory_space<vmem>>, vector<1x128xf32>
    %15 = vector.broadcast %14 : vector<1x128xf32> to vector<8x128xf32>
    %16 = arith.addf %13, %15 : vector<8x128xf32>
    %cst_16 = arith.constant 0.000000e+00 : f32
    %17 = vector.broadcast %cst_16 : f32 to vector<8x128xf32>
    %18 = arith.maximumf %16, %17 : vector<8x128xf32>
    %c0_17 = arith.constant 0 : index
    %c0_18 = arith.constant 0 : index
    %19 = vector.load %arg8[%c0_17, %c0_18] : memref<128x6xf32, #tpu.memory_space<vmem>>, vector<128x6xf32>
    %cst_19 = arith.constant dense<0.000000e+00> : vector<8x6xf32>
    %20 = tpu.matmul %18, %19, %cst_19 {dimension_numbers = #tpu.dot_dimension_numbers<[1], [0], [0], [1], [0, 0, 1, 1], [], []>} : vector<8x128xf32>, vector<128x6xf32>, vector<8x6xf32> -> vector<8x6xf32>
    %c0_20 = arith.constant 0 : index
    %c0_21 = arith.constant 0 : index
    %21 = vector.load %arg9[%c0_20, %c0_21] : memref<1x6xf32, #tpu.memory_space<vmem>>, vector<1x6xf32>
    %22 = vector.broadcast %21 : vector<1x6xf32> to vector<8x6xf32>
    %23 = arith.addf %20, %22 : vector<8x6xf32>
    %c0_22 = arith.constant 0 : index
    %c0_23 = arith.constant 0 : index
    %24 = vector.load %arg10[%c0_22, %c0_23] : memref<8x6xf32, #tpu.memory_space<vmem>>, vector<8x6xf32>
    tpu.vector_store %arg10[%c0_22, %c0_23], %23 {strides = array<i32>} : memref<8x6xf32, #tpu.memory_space<vmem>>, vector<8x6xf32>,
    return
  }
  func.func @transform_0(%arg0: i32) -> (i32, i32) {
    %c0_i32 = arith.constant 0 : i32
    %c0_i32_0 = arith.constant 0 : i32
    return %arg0, %c0_i32 : i32, i32
  }
  func.func @transform_1(%arg0: i32) -> (i32, i32) {
    %c0_i32 = arith.constant 0 : i32
    %c0_i32_0 = arith.constant 0 : i32
    return %arg0, %c0_i32 : i32, i32
  }
  func.func @transform_2(%arg0: i32) -> (i32, i32) {
    %c0_i32 = arith.constant 0 : i32
    %c0_i32_0 = arith.constant 0 : i32
    %c0_i32_1 = arith.constant 0 : i32
    return %c0_i32, %c0_i32_0 : i32, i32
  }
  func.func @transform_3(%arg0: i32) -> (i32, i32) {
    %c0_i32 = arith.constant 0 : i32
    %c0_i32_0 = arith.constant 0 : i32
    %c0_i32_1 = arith.constant 0 : i32
    return %c0_i32, %c0_i32_0 : i32, i32
  }
  func.func @transform_4(%arg0: i32) -> (i32, i32) {
    %c0_i32 = arith.constant 0 : i32
    %c0_i32_0 = arith.constant 0 : i32
    %c0_i32_1 = arith.constant 0 : i32
    return %c0_i32, %c0_i32_0 : i32, i32
  }
  func.func @transform_5(%arg0: i32) -> (i32, i32) {
    %c0_i32 = arith.constant 0 : i32
    %c0_i32_0 = arith.constant 0 : i32
    %c0_i32_1 = arith.constant 0 : i32
    return %c0_i32, %c0_i32_0 : i32, i32
  }
  func.func @transform_6(%arg0: i32) -> (i32, i32) {
    %c0_i32 = arith.constant 0 : i32
    %c0_i32_0 = arith.constant 0 : i32
    %c0_i32_1 = arith.constant 0 : i32
    return %c0_i32, %c0_i32_0 : i32, i32
  }
  func.func @transform_7(%arg0: i32) -> (i32, i32) {
    %c0_i32 = arith.constant 0 : i32
    %c0_i32_0 = arith.constant 0 : i32
    %c0_i32_1 = arith.constant 0 : i32
    return %c0_i32, %c0_i32_0 : i32, i32
  }
  func.func @transform_8(%arg0: i32) -> (i32, i32) {
    %c0_i32 = arith.constant 0 : i32
    %c0_i32_0 = arith.constant 0 : i32
    %c0_i32_1 = arith.constant 0 : i32
    return %c0_i32, %c0_i32_0 : i32, i32
  }
  func.func @transform_9(%arg0: i32) -> (i32, i32) {
    %c0_i32 = arith.constant 0 : i32
    %c0_i32_0 = arith.constant 0 : i32
    return %arg0, %c0_i32 : i32, i32
  }
}

</mosaic_0001>

<llo_original>
// kernel: tpu_custom_call.1
$region0: #{tpu_custom_call.1}
  #allocation0 [shape = 'u32[]', space=smem, size = 0x4, offset = 0x4, fixed_abs, tag = 'smem constant byte address 0x4 - core index']
  #allocation1 [shape = 'u32[144,128]{1,0:T(1,128)}', space=vmem, size = 0x12000, scoped, tag = 'internal scratch']
  %s0 = inlined_call_operand.vmem [shape: f32[8,16], index: 0, kind: input, shape index: {}]
  %s1 = inlined_call_operand.vmem [shape: f32[8,24], index: 1, kind: input, shape index: {}]
  %s2 = inlined_call_operand.vmem [shape: f32[16,64], index: 2, kind: input, shape index: {}]
  %s3 = inlined_call_operand.vmem [shape: f32[24,64], index: 3, kind: input, shape index: {}]
  %s4 = inlined_call_operand.vmem [shape: f32[1,64], index: 4, kind: input, shape index: {}]
  %s5 = inlined_call_operand.vmem [shape: f32[64,128], index: 5, kind: input, shape index: {}]
  %s6 = inlined_call_operand.vmem [shape: f32[1,128], index: 6, kind: input, shape index: {}]
  %s7 = inlined_call_operand.vmem [shape: f32[128,6], index: 7, kind: input, shape index: {}]
  %s8 = inlined_call_operand.vmem [shape: f32[1,6], index: 8, kind: input, shape index: {}]
  %s9 = inlined_call_operand.hbm [shape: f32[8,6], index: 9, kind: output, shape index: {}]
  %s10 = sld [smem:[#allocation0]]
  $region46: #{tpu_custom_call.1} parent=0
    _
  %s12 = ssub.s32 1, %s10
  %s13 = scalar_select 0, %s12, %s10
  $region1: #{tpu_custom_call.1} parent=0
    #allocation2 [shape = 'u8[4096]{0}', space=vmem, size = 0x1000, scoped, tag = 'output window, operand 0, single buffered']
    #allocation3 [shape = 's32[1]{0}', space=sflag, size = 0x4, scoped, tag = 'scoped memory for tpu_custom_call.1']
    %14 = vsyncpa [#allocation3], 0
    // Predicated region
    $region2: #{tpu_custom_call.1} parent=1 // pred_check
      _
    $region3: #{tpu_custom_call.1} parent=1 // pred_check_branch
      %16 = sbr.rel (0) target = $region5
    $region4: #{tpu_custom_call.1} parent=1 // pred_region
      _
    $region5: #{tpu_custom_call.1} parent=1 // pred_fallthru
      _
    // Predicated region
    $region6: #{tpu_custom_call.1} parent=1 // pred_check
      _
    $region7: #{tpu_custom_call.1} parent=1 // pred_check_branch
      %18 = sbr.rel (0) target = $region9
    $region8: #{tpu_custom_call.1} parent=1 // pred_region
      _
    $region9: #{tpu_custom_call.1} parent=1 // pred_fallthru
      _
    // Predicated region
    $region10: #{tpu_custom_call.1} parent=1 // pred_check
      _
    $region11: #{tpu_custom_call.1} parent=1 // pred_check_branch
      %20 = sbr.rel (0) target = $region13
    $region12: #{tpu_custom_call.1} parent=1 // pred_region
      _
    $region13: #{tpu_custom_call.1} parent=1 // pred_fallthru
      _
    // Predicated region
    $region14: #{tpu_custom_call.1} parent=1 // pred_check
      _
    $region15: #{tpu_custom_call.1} parent=1 // pred_check_branch
      %22 = sbr.rel (0) target = $region17
    $region16: #{tpu_custom_call.1} parent=1 // pred_region
      _
    $region17: #{tpu_custom_call.1} parent=1 // pred_fallthru
      _
    // Predicated region
    $region18: #{tpu_custom_call.1} parent=1 // pred_check
      _
    $region19: #{tpu_custom_call.1} parent=1 // pred_check_branch
      %24 = sbr.rel (0) target = $region21
    $region20: #{tpu_custom_call.1} parent=1 // pred_region
      _
    $region21: #{tpu_custom_call.1} parent=1 // pred_fallthru
      _
    // Predicated region
    $region22: #{tpu_custom_call.1} parent=1 // pred_check
      _
    $region23: #{tpu_custom_call.1} parent=1 // pred_check_branch
      %26 = sbr.rel (0) target = $region25
    $region24: #{tpu_custom_call.1} parent=1 // pred_region
      _
    $region25: #{tpu_custom_call.1} parent=1 // pred_fallthru
      _
    // Predicated region
    $region26: #{tpu_custom_call.1} parent=1 // pred_check
      _
    $region27: #{tpu_custom_call.1} parent=1 // pred_check_branch
      %28 = sbr.rel (0) target = $region29
    $region28: #{tpu_custom_call.1} parent=1 // pred_region
      _
    $region29: #{tpu_custom_call.1} parent=1 // pred_fallthru
      _
    // Predicated region
    $region30: #{tpu_custom_call.1} parent=1 // pred_check
      _
    $region31: #{tpu_custom_call.1} parent=1 // pred_check_branch
      %30 = sbr.rel (0) target = $region33
    $region32: #{tpu_custom_call.1} parent=1 // pred_region
      _
    $region33: #{tpu_custom_call.1} parent=1 // pred_fallthru
      _
    // Predicated region
    $region34: #{tpu_custom_call.1} parent=1 // pred_check
      _
    $region35: #{tpu_custom_call.1} parent=1 // pred_check_branch
      %32 = sbr.rel (0) target = $region37
    $region36: #{tpu_custom_call.1} parent=1 // pred_region
      _
    $region37: #{tpu_custom_call.1} parent=1 // pred_fallthru
      _
    %v33 = vld [vmem:[%s0] sm:$0xff]
    %v34 = vld [vmem:[%s2] sm:$0xff]
    %v35 = vld [vmem:[%s2 + $0x8] sm:$0xff]
    %v36 = vld [vmem:[%s1] sm:$0xff]
    %v37 = vld [vmem:[%s3] sm:$0xff]
    %v38 = vld [vmem:[%s3 + $0x8] sm:$0xff]
    %v39 = vld [vmem:[%s3 + $0x10] sm:$0xff]
    %vm40 = vcmask 195584
    %v42 = vsel %vm40, %v36, 0
    %44 = vmatprep.subr.mxu0 0.0
    %45 = vmatpush1.msra.mxu0 %v37
    %46 = vmatprep.subr.mxu0 0.0
    %47 = vmatpush1.msra.mxu0 %v38
    %48 = vmatprep.subr.mxu0 0.0
    %49 = vmatpush1.msra.mxu0 %v39
    %50 = vmatprep.subr.mxu0 0.0
    %51 = vmatpush1.msra.mxu0 0.0
    %52 = vmatprep.subr.mxu0 0.0
    %53 = vmatpush1.msra.mxu0 0.0
    %54 = vmatprep.subr.mxu0 0.0
    %55 = vmatpush1.msra.mxu0 0.0
    %56 = vmatprep.subr.mxu0 0.0
    %57 = vmatpush1.msra.mxu0 0.0
    %58 = vmatprep.subr.mxu0 0.0
    %59 = vmatpush1.msra.mxu0 0.0
    %60 = vmatprep.subr.mxu0 0.0
    %61 = vmatpush1.msra.mxu0 0.0
    %62 = vmatprep.subr.mxu0 0.0
    %63 = vmatpush1.msra.mxu0 0.0
    %64 = vmatprep.subr.mxu0 0.0
    %65 = vmatpush1.msra.mxu0 0.0
    %66 = vmatprep.subr.mxu0 0.0
    %67 = vmatpush1.msra.mxu0 0.0
    %68 = vmatprep.subr.mxu0 0.0
    %69 = vmatpush1.msra.mxu0 0.0
    %70 = vmatprep.subr.mxu0 0.0
    %71 = vmatpush1.msra.mxu0 0.0
    %72 = vmatprep.subr.mxu0 0.0
    %73 = vmatpush1.msra.mxu0 0.0
    %74 = vmatprep.subr.mxu0 0.0
    %75 = vmatpush1.msra.mxu0 0.0
    %76 = vmatprep.subr.mxu0 0.0
    %77 = vmatpush1.msra.mxu0 0.0
    %78 = vmatprep.subr.mxu0 0.0
    %79 = vmatpush1.msra.mxu0 0.0
    %80 = vmatprep.subr.mxu0 0.0
    %81 = vmatpush1.msra.mxu0 0.0
    %82 = vmatprep.subr.mxu0 0.0
    %83 = vmatpush1.msra.mxu0 0.0
    %84 = vmatprep.subr.mxu0 0.0
    %85 = vmatpush1.msra.mxu0 0.0
    %86 = vmatprep.subr.mxu0 0.0
    %87 = vmatpush1.msra.mxu0 0.0
    %88 = vmatprep.subr.mxu0 0.0
    %89 = vmatpush1.msra.mxu0 0.0
    %90 = vmatprep.subr.mxu0 0.0
    %91 = vmatpush1.msra.mxu0 0.0
    %92 = vmatprep.subr.mxu0 0.0
    %93 = vmatpush1.msra.mxu0 0.0
    %94 = vmatprep.subr.mxu0 0.0
    %95 = vmatpush1.msra.mxu0 0.0
    %96 = vmatprep.subr.mxu0 0.0
    %97 = vmatpush1.msra.mxu0 0.0
    %98 = vmatprep.subr.mxu0 0.0
    %99 = vmatpush1.msra.mxu0 0.0
    %100 = vmatprep.subr.mxu0 0.0
    %101 = vmatpush1.msra.mxu0 0.0
    %102 = vmatprep.subr.mxu0 0.0
    %103 = vmatpush1.msra.mxu0 0.0
    %104 = vmatprep.subr.mxu0 0.0
    %105 = vmatpush1.msra.mxu0 0.0
    %106 = vmatprep.subr.mxu0 0.0
    %107 = vmatpush1.msra.mxu0 0.0
    %108 = vmatprep.mubr.f32.mxu0 0.0
    %109 = vmatmul.mubr.f32.gmra.mrb[0].mxu0 %v42
    %v110 = vpop.f32.mrb[0].mxu0
    %v111 = vadd.f32 0.0, %v110
    %v112 = vpop.f32.mrb[0].mxu0
    %113 = vdwg.mxu0
    %vm114 = vcmask 130048
    %v116 = vsel %vm114, %v33, 0
    %118 = vmatprep.subr.mxu0 0.0
    %119 = vmatpush1.msra.mxu0 %v34
    %120 = vmatprep.subr.mxu0 0.0
    %121 = vmatpush1.msra.mxu0 %v35
    %122 = vmatprep.subr.mxu0 0.0
    %123 = vmatpush1.msra.mxu0 0.0
    %124 = vmatprep.subr.mxu0 0.0
    %125 = vmatpush1.msra.mxu0 0.0
    %126 = vmatprep.subr.mxu0 0.0
    %127 = vmatpush1.msra.mxu0 0.0
    %128 = vmatprep.subr.mxu0 0.0
    %129 = vmatpush1.msra.mxu0 0.0
    %130 = vmatprep.subr.mxu0 0.0
    %131 = vmatpush1.msra.mxu0 0.0
    %132 = vmatprep.subr.mxu0 0.0
    %133 = vmatpush1.msra.mxu0 0.0
    %134 = vmatprep.subr.mxu0 0.0
    %135 = vmatpush1.msra.mxu0 0.0
    %136 = vmatprep.subr.mxu0 0.0
    %137 = vmatpush1.msra.mxu0 0.0
    %138 = vmatprep.subr.mxu0 0.0
    %139 = vmatpush1.msra.mxu0 0.0
    %140 = vmatprep.subr.mxu0 0.0
    %141 = vmatpush1.msra.mxu0 0.0
    %142 = vmatprep.subr.mxu0 0.0
    %143 = vmatpush1.msra.mxu0 0.0
    %144 = vmatprep.subr.mxu0 0.0
    %145 = vmatpush1.msra.mxu0 0.0
    %146 = vmatprep.subr.mxu0 0.0
    %147 = vmatpush1.msra.mxu0 0.0
    %148 = vmatprep.subr.mxu0 0.0
    %149 = vmatpush1.msra.mxu0 0.0
    %150 = vmatprep.subr.mxu0 0.0
    %151 = vmatpush1.msra.mxu0 0.0
    %152 = vmatprep.subr.mxu0 0.0
    %153 = vmatpush1.msra.mxu0 0.0
    %154 = vmatprep.subr.mxu0 0.0
    %155 = vmatpush1.msra.mxu0 0.0
    %156 = vmatprep.subr.mxu0 0.0
    %157 = vmatpush1.msra.mxu0 0.0
    %158 = vmatprep.subr.mxu0 0.0
    %159 = vmatpush1.msra.mxu0 0.0
    %160 = vmatprep.subr.mxu0 0.0
    %161 = vmatpush1.msra.mxu0 0.0
    %162 = vmatprep.subr.mxu0 0.0
    %163 = vmatpush1.msra.mxu0 0.0
    %164 = vmatprep.subr.mxu0 0.0
    %165 = vmatpush1.msra.mxu0 0.0
    %166 = vmatprep.subr.mxu0 0.0
    %167 = vmatpush1.msra.mxu0 0.0
    %168 = vmatprep.subr.mxu0 0.0
    %169 = vmatpush1.msra.mxu0 0.0
    %170 = vmatprep.subr.mxu0 0.0
    %171 = vmatpush1.msra.mxu0 0.0
    %172 = vmatprep.subr.mxu0 0.0
    %173 = vmatpush1.msra.mxu0 0.0
    %174 = vmatprep.subr.mxu0 0.0
    %175 = vmatpush1.msra.mxu0 0.0
    %176 = vmatprep.subr.mxu0 0.0
    %177 = vmatpush1.msra.mxu0 0.0
    %178 = vmatprep.subr.mxu0 0.0
    %179 = vmatpush1.msra.mxu0 0.0
    %180 = vmatprep.subr.mxu0 0.0
    %181 = vmatpush1.msra.mxu0 0.0
    %182 = vmatprep.mubr.f32.mxu0 0.0
    %183 = vmatmul.mubr.f32.gmra.mrb[0].mxu0 %v116
    %v184 = vpop.f32.mrb[0].mxu0
    %v185 = vadd.f32 %v111, %v184
    %v186 = vpop.f32.mrb[0].mxu0
    %187 = vdwg.mxu0
    %v188 = vld [vmem:[%s4] sm:$0x1]
    %v190 = vlaneseq
    %v191 = vshrl.u32 %v190, 7
    %v192 = vsub.s32 0, %v191
    %v193 = vrot.slane %v188, %v192
    %v195 = vadd.f32 %v185, %v193
    %v196 = vmax.f32 %v195, 0.0
    %v197 = vld [vmem:[%s5] sm:$0xff]
    %v198 = vld [vmem:[%s5 + $0x8] sm:$0xff]
    %v199 = vld [vmem:[%s5 + $0x10] sm:$0xff]
    %v200 = vld [vmem:[%s5 + $0x18] sm:$0xff]
    %v201 = vld [vmem:[%s5 + $0x20] sm:$0xff]
    %v202 = vld [vmem:[%s5 + $0x28] sm:$0xff]
    %v203 = vld [vmem:[%s5 + $0x30] sm:$0xff]
    %v204 = vld [vmem:[%s5 + $0x38] sm:$0xff]
    %v205 = vld [vmem:[%s6] sm:$0x1]
    %v207 = vlaneseq
    %v208 = vshrl.u32 %v207, 7
    %v209 = vsub.s32 0, %v208
    %v210 = vrot.slane %v205, %v209
    %vm212 = vcmask 523264
    %v214 = vsel %vm212, %v196, 0
    %216 = vmatprep.subr.mxu0 0.0
    %217 = vmatpush1.msra.mxu0 %v197
    %218 = vmatprep.subr.mxu0 0.0
    %219 = vmatpush1.msra.mxu0 %v198
    %220 = vmatprep.subr.mxu0 0.0
    %221 = vmatpush1.msra.mxu0 %v199
    %222 = vmatprep.subr.mxu0 0.0
    %223 = vmatpush1.msra.mxu0 %v200
    %224 = vmatprep.subr.mxu0 0.0
    %225 = vmatpush1.msra.mxu0 %v201
    %226 = vmatprep.subr.mxu0 0.0
    %227 = vmatpush1.msra.mxu0 %v202
    %228 = vmatprep.subr.mxu0 0.0
    %229 = vmatpush1.msra.mxu0 %v203
    %230 = vmatprep.subr.mxu0 0.0
    %231 = vmatpush1.msra.mxu0 %v204
    %232 = vmatprep.subr.mxu0 0.0
    %233 = vmatpush1.msra.mxu0 0.0
    %234 = vmatprep.subr.mxu0 0.0
    %235 = vmatpush1.msra.mxu0 0.0
    %236 = vmatprep.subr.mxu0 0.0
    %237 = vmatpush1.msra.mxu0 0.0
    %238 = vmatprep.subr.mxu0 0.0
    %239 = vmatpush1.msra.mxu0 0.0
    %240 = vmatprep.subr.mxu0 0.0
    %241 = vmatpush1.msra.mxu0 0.0
    %242 = vmatprep.subr.mxu0 0.0
    %243 = vmatpush1.msra.mxu0 0.0
    %244 = vmatprep.subr.mxu0 0.0
    %245 = vmatpush1.msra.mxu0 0.0
    %246 = vmatprep.subr.mxu0 0.0
    %247 = vmatpush1.msra.mxu0 0.0
    %248 = vmatprep.subr.mxu0 0.0
    %249 = vmatpush1.msra.mxu0 0.0
    %250 = vmatprep.subr.mxu0 0.0
    %251 = vmatpush1.msra.mxu0 0.0
    %252 = vmatprep.subr.mxu0 0.0
    %253 = vmatpush1.msra.mxu0 0.0
    %254 = vmatprep.subr.mxu0 0.0
    %255 = vmatpush1.msra.mxu0 0.0
    %256 = vmatprep.subr.mxu0 0.0
    %257 = vmatpush1.msra.mxu0 0.0
    %258 = vmatprep.subr.mxu0 0.0
    %259 = vmatpush1.msra.mxu0 0.0
    %260 = vmatprep.subr.mxu0 0.0
    %261 = vmatpush1.msra.mxu0 0.0
    %262 = vmatprep.subr.mxu0 0.0
    %263 = vmatpush1.msra.mxu0 0.0
    %264 = vmatprep.subr.mxu0 0.0
    %265 = vmatpush1.msra.mxu0 0.0
    %266 = vmatprep.subr.mxu0 0.0
    %267 = vmatpush1.msra.mxu0 0.0
    %268 = vmatprep.subr.mxu0 0.0
    %269 = vmatpush1.msra.mxu0 0.0
    %270 = vmatprep.subr.mxu0 0.0
    %271 = vmatpush1.msra.mxu0 0.0
    %272 = vmatprep.subr.mxu0 0.0
    %273 = vmatpush1.msra.mxu0 0.0
    %274 = vmatprep.subr.mxu0 0.0
    %275 = vmatpush1.msra.mxu0 0.0
    %276 = vmatprep.subr.mxu0 0.0
    %277 = vmatpush1.msra.mxu0 0.0
    %278 = vmatprep.subr.mxu0 0.0
    %279 = vmatpush1.msra.mxu0 0.0
    %280 = vmatprep.mubr.f32.mxu0 0.0
    %281 = vmatmul.mubr.f32.gmra.mrb[0].mxu0 %v214
    %v282 = vpop.f32.mrb[0].mxu0
    %v283 = vadd.f32 %v210, %v282
    %v284 = vpop.f32.mrb[0].mxu0
    %285 = vdwg.mxu0
    %v286 = vmax.f32 %v283, 0.0
    %v287 = vld [vmem:[%s7] sm:$0xff]
    %v288 = vld [vmem:[%s7 + $0x8] sm:$0xff]
    %v289 = vld [vmem:[%s7 + $0x10] sm:$0xff]
    %v290 = vld [vmem:[%s7 + $0x18] sm:$0xff]
    %v291 = vld [vmem:[%s7 + $0x20] sm:$0xff]
    %v292 = vld [vmem:[%s7 + $0x28] sm:$0xff]
    %v293 = vld [vmem:[%s7 + $0x30] sm:$0xff]
    %v294 = vld [vmem:[%s7 + $0x38] sm:$0xff]
    %v295 = vld [vmem:[%s7 + $0x40] sm:$0xff]
    %v296 = vld [vmem:[%s7 + $0x48] sm:$0xff]
    %v297 = vld [vmem:[%s7 + $0x50] sm:$0xff]
    %v298 = vld [vmem:[%s7 + $0x58] sm:$0xff]
    %v299 = vld [vmem:[%s7 + $0x60] sm:$0xff]
    %v300 = vld [vmem:[%s7 + $0x68] sm:$0xff]
    %v301 = vld [vmem:[%s7 + $0x70] sm:$0xff]
    %v302 = vld [vmem:[%s7 + $0x78] sm:$0xff]
    %v303 = vld [vmem:[%s8] sm:$0x1]
    %v305 = vlaneseq
    %v306 = vshrl.u32 %v305, 7
    %v307 = vsub.s32 0, %v306
    %v308 = vrot.slane %v303, %v307
    %310 = vmatprep.subr.mxu0 0.0
    %311 = vmatpush1.msra.mxu0 %v287
    %312 = vmatprep.subr.mxu0 0.0
    %313 = vmatpush1.msra.mxu0 %v288
    %314 = vmatprep.subr.mxu0 0.0
    %315 = vmatpush1.msra.mxu0 %v289
    %316 = vmatprep.subr.mxu0 0.0
    %317 = vmatpush1.msra.mxu0 %v290
    %318 = vmatprep.subr.mxu0 0.0
    %319 = vmatpush1.msra.mxu0 %v291
    %320 = vmatprep.subr.mxu0 0.0
    %321 = vmatpush1.msra.mxu0 %v292
    %322 = vmatprep.subr.mxu0 0.0
    %323 = vmatpush1.msra.mxu0 %v293
    %324 = vmatprep.subr.mxu0 0.0
    %325 = vmatpush1.msra.mxu0 %v294
    %326 = vmatprep.subr.mxu0 0.0
    %327 = vmatpush1.msra.mxu0 %v295
    %328 = vmatprep.subr.mxu0 0.0
    %329 = vmatpush1.msra.mxu0 %v296
    %330 = vmatprep.subr.mxu0 0.0
    %331 = vmatpush1.msra.mxu0 %v297
    %332 = vmatprep.subr.mxu0 0.0
    %333 = vmatpush1.msra.mxu0 %v298
    %334 = vmatprep.subr.mxu0 0.0
    %335 = vmatpush1.msra.mxu0 %v299
    %336 = vmatprep.subr.mxu0 0.0
    %337 = vmatpush1.msra.mxu0 %v300
    %338 = vmatprep.subr.mxu0 0.0
    %339 = vmatpush1.msra.mxu0 %v301
    %340 = vmatprep.subr.mxu0 0.0
    %341 = vmatpush1.msra.mxu0 %v302
    %342 = vmatprep.subr.mxu0 0.0
    %343 = vmatpush1.msra.mxu0 0.0
    %344 = vmatprep.subr.mxu0 0.0
    %345 = vmatpush1.msra.mxu0 0.0
    %346 = vmatprep.subr.mxu0 0.0
    %347 = vmatpush1.msra.mxu0 0.0
    %348 = vmatprep.subr.mxu0 0.0
    %349 = vmatpush1.msra.mxu0 0.0
    %350 = vmatprep.subr.mxu0 0.0
    %351 = vmatpush1.msra.mxu0 0.0
    %352 = vmatprep.subr.mxu0 0.0
    %353 = vmatpush1.msra.mxu0 0.0
    %354 = vmatprep.subr.mxu0 0.0
    %355 = vmatpush1.msra.mxu0 0.0
    %356 = vmatprep.subr.mxu0 0.0
    %357 = vmatpush1.msra.mxu0 0.0
    %358 = vmatprep.subr.mxu0 0.0
    %359 = vmatpush1.msra.mxu0 0.0
    %360 = vmatprep.subr.mxu0 0.0
    %361 = vmatpush1.msra.mxu0 0.0
    %362 = vmatprep.subr.mxu0 0.0
    %363 = vmatpush1.msra.mxu0 0.0
    %364 = vmatprep.subr.mxu0 0.0
    %365 = vmatpush1.msra.mxu0 0.0
    %366 = vmatprep.subr.mxu0 0.0
    %367 = vmatpush1.msra.mxu0 0.0
    %368 = vmatprep.subr.mxu0 0.0
    %369 = vmatpush1.msra.mxu0 0.0
    %370 = vmatprep.subr.mxu0 0.0
    %371 = vmatpush1.msra.mxu0 0.0
    %372 = vmatprep.subr.mxu0 0.0
    %373 = vmatpush1.msra.mxu0 0.0
    %374 = vmatprep.mubr.f32.mxu0 0.0
    %375 = vmatmul.mubr.f32.gmra.mrb[0].mxu0 %v286
    %v376 = vpop.f32.mrb[0].mxu0
    %v377 = vadd.f32 %v308, %v376
    %v378 = vpop.f32.mrb[0].mxu0
    %379 = vdwg.mxu0
    %vm380 = vcmask 48128
    %381 = vst.msk [vmem:[#allocation2] sm:$0xff] %vm380, %v377
    // Predicated region
    $region38: #{tpu_custom_call.1} parent=1 // pred_check
      _
    $region39: #{tpu_custom_call.1} parent=1 // pred_check_branch
      %383 = sbr.rel (0) target = $region41
    $region40: #{tpu_custom_call.1} parent=1 // pred_region
      %s385 = ssub.s32 128, 128
      %386 = vsyncadd [#allocation3], %s385
      %s388 = sshll.u32 [#allocation2], 4
      %s389 = int_to_ptr.vmem [resolvable:$true] %s388
      %391 = dma.vmem_to_hbm [thread:$0]  %s389, 128, %s9, [#allocation3]
    $region41: #{tpu_custom_call.1} parent=1 // pred_fallthru
      _
    // Predicated region
    $region42: #{tpu_custom_call.1} parent=1 // pred_check
      _
    $region43: #{tpu_custom_call.1} parent=1 // pred_check_branch
      %393 = sbr.rel (0) target = $region45
    $region44: #{tpu_custom_call.1} parent=1 // pred_region
      %394 = dma.done [#allocation3], 128
    $region45: #{tpu_custom_call.1} parent=1 // pred_fallthru
      _
    %395 = vsyncpa [#allocation3], 1

</llo_original>
